<compile_context>
chip_gen: v6e
topology: v6e:2x2x1
jax: 0.10.0
libtpu: 0.0.40
codegen_flags: <defaults>
</compile_context>

<pallas_src>
import jax
import jax.numpy as jnp
from jax import lax
from jax.experimental import pallas as pl
from jax.experimental.pallas import tpu as pltpu


def _round_up(x, m):
    return ((x + m - 1) // m) * m


# ----------------------------------------------------------------------------
# Pallas kernel: fused linear classifier + log_softmax, time-major output.
# ----------------------------------------------------------------------------
def _logprobs_tbv_kernel(x_ref, w_ref, b_ref, o_ref):
    """x_ref: (B, tt, D) f32; w_ref: (D, Vp) bf16; b_ref: (1, Vp) f32; o_ref: (tt, B*Vp).

    One fused MXU matmul over all B*tt rows (f32 accumulation), a single stable f32
    log_softmax over the (B*tt, Vp) logits, then B aligned full-lane column stores so the
    output is already time-major ((T, B, Vp) as a flat (T, B*Vp) row-major array).
    """
    n_batch, tt, d = x_ref.shape
    vp = w_ref.shape[1]
    # In-kernel f32 -> bf16 cast (cheap VPU work hidden under the matmul); the reshape is
    # a free leading-dim merge (tt is a multiple of 16, lane dim D untouched).
    x = x_ref[...].astype(jnp.bfloat16).reshape(n_batch * tt, d)
    logits = jnp.dot(x, w_ref[...], preferred_element_type=jnp.float32) + b_ref[...]
    # Stable log_softmax in f32 (v5e VPU/EUP have no bf16).
    # TODO(synk): on v6e/v7x, exp() could run in bf16 (sum/log stay f32) once the kernel
    #             becomes MXU/EUP-bound for large D/V.
    m = jnp.max(logits, axis=-1, keepdims=True)
    shifted = logits - m
    lse = jnp.log(jnp.sum(jnp.exp(shifted), axis=-1, keepdims=True))
    lp = (shifted - lse).astype(o_ref.dtype)          # (B*tt, Vp)
    for b in range(n_batch):                          # static & small: store-only loop
        o_ref[:, b * vp:(b + 1) * vp] = lp[b * tt:(b + 1) * tt, :]


# ----------------------------------------------------------------------------
# Tiling / VMEM budgeting (generation-aware).
# ----------------------------------------------------------------------------
_MIN_TT = 16  # bf16 sublane packing of the input tile


def _vmem_capacity_bytes():
    try:
        return int(pltpu.get_tpu_info().vmem_capacity_bytes)
    except Exception:
        return 64 * 1024 * 1024  # conservative default (v7x has 64 MiB per TensorCore)


def _per_step_vmem_bytes(n_batch, tt, d, vp):
    x_bytes = 2 * n_batch * tt * d * 4        # f32 input tile, double-buffered
    w_bytes = 2 * (d * vp * 2 + vp * 4)       # resident bf16 weight + f32 bias, 2x buffered
    out_bytes = 2 * tt * n_batch * vp * 4     # f32 output tile, double-buffered
    tmp_bytes = 3 * n_batch * tt * vp * 4     # logits / softmax temporaries (rough)
    return x_bytes + w_bytes + out_bytes + tmp_bytes


def _choose_time_tile(n_batch, t, d, vp, tt_req, step_budget):
    tt_eff = max(_MIN_TT, min(_round_up(tt_req, _MIN_TT), _round_up(t, _MIN_TT)))
    while tt_eff > _MIN_TT and _per_step_vmem_bytes(n_batch, tt_eff, d, vp) > step_budget:
        tt_eff = max(_MIN_TT, _round_up(tt_eff // 2, _MIN_TT))
    # Ensure >= 2 grid steps when T allows it, so dimension_semantics=("parallel",) can
    # spread time tiles across both v7x TensorCores (cheap elsewhere: ~0.35 us/step).
    if t >= 2 * _MIN_TT and pl.cdiv(t, tt_eff) < 2:
        tt_eff = min(tt_eff, max(_MIN_TT, _round_up(pl.cdiv(t, 2), _MIN_TT)))
    return tt_eff


def _build_logprobs_call(n_batch, t, d, vp, tt, out_dtype, vmem_limit):
    return pl.pallas_call(
        _logprobs_tbv_kernel,
        out_shape=jax.ShapeDtypeStruct((t, n_batch * vp), out_dtype),
        grid_spec=pltpu.PrefetchScalarGridSpec(
            num_scalar_prefetch=0,
            grid=(pl.cdiv(t, tt),),
            in_specs=[
                pl.BlockSpec((n_batch, tt, d), lambda i: (0, i, 0)),
                # Constant block index across the grid -> weight/bias stay resident.
                # TODO(synk): single-buffer via pipeline_mode=pl.Buffered(1) once the JAX
                #             version is pinned; budgeted as double-buffered above.
                pl.BlockSpec((d, vp), lambda i: (0, 0)),
                pl.BlockSpec((1, vp), lambda i: (0, 0)),
            ],
            out_specs=pl.BlockSpec((tt, n_batch * vp), lambda i: (i, 0)),
        ),
        compiler_params=pltpu.CompilerParams(
            dimension_semantics=("parallel",),
            vmem_limit_bytes=vmem_limit,
        ),
    )


def log_probs_tbv_pallas(features, weight, bias, *, tt=512, out_dtype=jnp.float32):
    """features: (B, T, D) f32; weight: (V, D) (nn.Linear layout); bias: (V,) f32.

    Returns log_softmax(features @ weight.T + bias) already permuted to (T, B, V).
    Matmul runs with bf16 operands (f32 accumulation); bias add + softmax math in f32.
    bf16 output is opt-in via out_dtype (re-validate the CTC DP before enabling).
    """
    n_batch, t, d = features.shape
    v = weight.shape[0]
    assert weight.shape == (v, d)

    # Pad the vocab to a lane multiple so every per-batch column store is an unmasked
    # full-lane vst; pad bias of -1e30 makes the pad columns exact no-ops in the lse.
    vp = _round_up(v, 128)
    w_t = weight.T.astype(jnp.bfloat16)                   # (D, V) bf16, resident in VMEM
    b2 = bias.astype(jnp.float32).reshape(1, v)
    if vp != v:
        w_t = jnp.pad(w_t, ((0, 0), (0, vp - v)))
        b2 = jnp.pad(b2, ((0, 0), (0, vp - v)), constant_values=-1e30)

    vmem_cap = _vmem_capacity_bytes()
    step_budget = vmem_cap // 2                           # ~32 MiB v7x, ~64 MiB v5e/v6e
    tt_eff = _choose_time_tile(n_batch, t, d, vp, tt, step_budget)
    vmem_limit = int(min(vmem_cap - 8 * 1024 * 1024, 112 * 1024 * 1024))

    # features are DMA'd as f32 directly (no wrapper-side cast/pad pass over the input).
    out = _build_logprobs_call(n_batch, t, d, vp, tt_eff, out_dtype, vmem_limit)(
        features, w_t, b2)
    out = out.reshape(t, n_batch, vp)                     # free: (T, B*Vp) row-major == (T, B, Vp)
    if vp != v:
        out = out[:, :, :v]                               # drop lane-padding columns
    return out


# ----------------------------------------------------------------------------
# Plain-JAX CTC loss (reduction='mean', blank=0), matching torch.nn.functional.ctc_loss.
# Small sequential DP over time -> kept in glue (lax.scan), not in the Pallas kernel.
# Requires target_lengths >= 1.  TODO(synk): handle zero-length targets like torch.
# ----------------------------------------------------------------------------
def ctc_loss_mean(log_probs_tbv, targets, input_lengths, target_lengths, blank=0):
    T, B, V = log_probs_tbv.shape
    S = targets.shape[1]
    L = 2 * S + 1
    neg_inf = -jnp.inf

    tgt = targets.astype(jnp.int32)
    ext = jnp.full((B, L), blank, dtype=jnp.int32)
    ext = ext.at[:, 1::2].set(tgt)                               # [blank, t1, blank, t2, ...]

    same_as_two_back = jnp.concatenate(
        [jnp.ones((B, 2), dtype=bool), ext[:, 2:] == ext[:, :-2]], axis=1)

    def shift_right(a, k):
        return jnp.concatenate([jnp.full((B, k), neg_inf, a.dtype), a[:, :-k]], axis=1)

    lp0 = log_probs_tbv[0]                                       # (B, V)
    alpha0 = jnp.full((B, L), neg_inf, jnp.float32)
    alpha0 = alpha0.at[:, 0].set(lp0[:, blank])
    alpha0 = alpha0.at[:, 1].set(
        jnp.take_along_axis(lp0, tgt[:, :1], axis=1)[:, 0])

    def step(carry, lp_t):
        alpha_prev, t = carry
        e = jnp.take_along_axis(lp_t, ext, axis=1)               # (B, L)
        a1 = alpha_prev
        a2 = shift_right(alpha_prev, 1)
        a3 = jnp.where(same_as_two_back, neg_inf, shift_right(alpha_prev, 2))
        alpha_new = e + jnp.logaddexp(jnp.logaddexp(a1, a2), a3)
        valid = (t < input_lengths)[:, None]
        alpha_new = jnp.where(valid, alpha_new, alpha_prev)
        return (alpha_new, t + 1), None

    (alpha_T, _), _ = lax.scan(step, (alpha0, jnp.int32(1)), log_probs_tbv[1:])

    idx_last = (2 * target_lengths).astype(jnp.int32)            # (B,)
    end1 = jnp.take_along_axis(alpha_T, idx_last[:, None], axis=1)[:, 0]
    end2 = jnp.take_along_axis(alpha_T, (idx_last - 1)[:, None], axis=1)[:, 0]
    nll = -jnp.logaddexp(end1, end2)                             # per-sequence -log p
    # torch reduction='mean': divide by target length, then mean over batch.
    return jnp.mean(nll / target_lengths.astype(nll.dtype))


# ----------------------------------------------------------------------------
# TemporalClassifier.forward equivalent (star_penalty=None branch, eval mode).
# ----------------------------------------------------------------------------
def temporal_classifier_forward(features, targets, weight, bias,
                                input_lengths=None, target_lengths=None):
    B, T, _ = features.shape
    if input_lengths is None:
        input_lengths = jnp.full((B,), T, dtype=jnp.int32)
    if target_lengths is None:
        target_lengths = jnp.full((B,), targets.shape[1], dtype=jnp.int32)

    # Dropout(0.2): identity in eval mode.
    # TODO(synk): training-mode dropout would use pltpu.prng_seed / prng_random_bits in-kernel.
    log_probs_tbv = log_probs_tbv_pallas(features, weight, bias).astype(jnp.float32)
    loss = ctc_loss_mean(log_probs_tbv, targets, input_lengths, target_lengths)
    return loss, {}


if __name__ == "__main__":
    # Small shapes consistent with the module (feat_dim=128, vocab_size=128 here).
    B, T, D, V, S = 2, 200, 128, 128, 12

    key = jax.random.PRNGKey(0)
    k_x, k_w, k_b, k_t = jax.random.split(key, 4)

    features = jax.random.normal(k_x, (B, T, D), dtype=jnp.float32)
    # nn.Linear(feat_dim, vocab_size): weight (V, D), bias (V).
    bound = 1.0 / (D ** 0.5)
    weight = jax.random.uniform(k_w, (V, D), minval=-bound, maxval=bound, dtype=jnp.float32)
    bias = jax.random.uniform(k_b, (V,), minval=-bound, maxval=bound, dtype=jnp.float32)
    # CTC targets: labels in [1, V) (0 is the blank), shape (B, S).
    targets = jax.random.randint(k_t, (B, S), 1, V, dtype=jnp.int32)

    def ref_log_probs_tbv(x, w, b):
        logits = jnp.einsum("btd,dv->btv", x.astype(jnp.bfloat16),
                            w.T.astype(jnp.bfloat16),
                            preferred_element_type=jnp.float32) + b
        return jnp.transpose(jax.nn.log_softmax(logits, axis=-1), (1, 0, 2))

    lp_ref = ref_log_probs_tbv(features, weight, bias)

    # Multi-step grid with a partial last time block (T=200, tt=64 -> 4 steps).
    lp_small = log_probs_tbv_pallas(features, weight, bias, tt=64)
    assert lp_small.shape == (T, B, V)
    assert jnp.allclose(lp_small, lp_ref, atol=2e-2, rtol=2e-2), "log_probs mismatch (tt=64)"

    # Default tile path (>= 2 grid steps for megacore, partial last block).
    lp_default = log_probs_tbv_pallas(features, weight, bias)
    assert jnp.allclose(lp_default, lp_ref, atol=2e-2, rtol=2e-2), "log_probs mismatch (default tt)"

    # Vocab that is not a multiple of 128 -> lane-padded weight/bias path.
    V2 = 100
    lp_pad = log_probs_tbv_pallas(features, weight[:V2], bias[:V2], tt=64)
    lp_pad_ref = ref_log_probs_tbv(features, weight[:V2], bias[:V2])
    assert lp_pad.shape == (T, B, V2)
    assert jnp.allclose(lp_pad, lp_pad_ref, atol=2e-2, rtol=2e-2), "log_probs mismatch (padded V)"

    loss, aux = temporal_classifier_forward(features, targets, weight, bias)
    loss = jax.block_until_ready(loss)
    assert jnp.isfinite(loss), "non-finite CTC loss"
    print("KERNEL_OK")
</pallas_src>

<mosaic_0001>
module attributes {stable_mosaic.version = 11 : i64} {
  func.func @_logprobs_tbv_kernel(%arg0: i32, %arg1: memref<2x64x128xf32, #tpu.memory_space<vmem>>, %arg2: memref<128x128xbf16, #tpu.memory_space<vmem>>, %arg3: memref<1x128xf32, #tpu.memory_space<vmem>>, %arg4: memref<64x256xf32, #tpu.memory_space<vmem>>) attributes {dimension_semantics = [#tpu.dimension_semantics<parallel>], iteration_bounds = array<i64: 4>, scalar_prefetch = 0 : i64, scratch_operands = 0 : i64, tpu.core_type = #tpu.core_type<tc>, window_params = [{transform_indices = @transform_0, window_bounds = array<i64: 2, 64, 128>}, {pipeline_mode = #tpu.pipeline_mode<synchronous>, transform_indices = @transform_1, window_bounds = array<i64: 128, 128>}, {pipeline_mode = #tpu.pipeline_mode<synchronous>, transform_indices = @transform_2, window_bounds = array<i64: 1, 128>}, {transform_indices = @transform_3, window_bounds = array<i64: 64, 256>}]} {
    %c0 = arith.constant 0 : index
    %c0_0 = arith.constant 0 : index
    %c0_1 = arith.constant 0 : index
    %0 = vector.load %arg1[%c0, %c0_0, %c0_1] : memref<2x64x128xf32, #tpu.memory_space<vmem>>, vector<2x64x128xf32>
    %1 = arith.truncf %0 : vector<2x64x128xf32> to vector<2x64x128xbf16>
    %2 = vector.shape_cast %1 : vector<2x64x128xbf16> to vector<128x128xbf16>
    %c0_2 = arith.constant 0 : index
    %c0_3 = arith.constant 0 : index
    %3 = vector.load %arg2[%c0_2, %c0_3] : memref<128x128xbf16, #tpu.memory_space<vmem>>, vector<128x128xbf16>
    %cst = arith.constant dense<0.000000e+00> : vector<128x128xf32>
    %4 = tpu.matmul %2, %3, %cst {dimension_numbers = #tpu.dot_dimension_numbers<[1], [0], [0], [1], [0, 0, 1, 1], [], []>} : vector<128x128xbf16>, vector<128x128xbf16>, vector<128x128xf32> -> vector<128x128xf32>
    %c0_4 = arith.constant 0 : index
    %c0_5 = arith.constant 0 : index
    %5 = vector.load %arg3[%c0_4, %c0_5] : memref<1x128xf32, #tpu.memory_space<vmem>>, vector<1x128xf32>
    %6 = vector.broadcast %5 : vector<1x128xf32> to vector<128x128xf32>
    %7 = arith.addf %4, %6 : vector<128x128xf32>
    %cst_6 = arith.constant dense<0xFF800000> : vector<128xf32>
    %8 = vector.multi_reduction <maximumf>, %7, %cst_6 [1] : vector<128x128xf32> to vector<128xf32>
    %9 = vector.shape_cast %8 : vector<128xf32> to vector<128x1xf32>
    %10 = vector.broadcast %9 : vector<128x1xf32> to vector<128x128xf32>
    %11 = arith.subf %7, %10 : vector<128x128xf32>
    %12 = math.exp %11 : vector<128x128xf32>
    %cst_7 = arith.constant dense<0.000000e+00> : vector<128xf32>
    %13 = vector.multi_reduction <add>, %12, %cst_7 [1] : vector<128x128xf32> to vector<128xf32>
    %14 = vector.shape_cast %13 : vector<128xf32> to vector<128x1xf32>
    %15 = math.log %14 : vector<128x1xf32>
    %16 = vector.broadcast %15 : vector<128x1xf32> to vector<128x128xf32>
    %17 = arith.subf %11, %16 : vector<128x128xf32>
    %18 = vector.extract_strided_slice %17 {offsets = [0, 0], sizes = [64, 128], strides = [1, 1]} : vector<128x128xf32> to vector<64x128xf32>
    %c0_8 = arith.constant 0 : index
    %c0_9 = arith.constant 0 : index
    %19 = vector.load %arg4[%c0_8, %c0_9] : memref<64x256xf32, #tpu.memory_space<vmem>>, vector<64x128xf32>
    tpu.vector_store %arg4[%c0_8, %c0_9], %18 {strides = array<i32>} : memref<64x256xf32, #tpu.memory_space<vmem>>, vector<64x128xf32>,
    %20 = vector.extract_strided_slice %17 {offsets = [64, 0], sizes = [64, 128], strides = [1, 1]} : vector<128x128xf32> to vector<64x128xf32>
    %c0_10 = arith.constant 0 : index
    %c128 = arith.constant 128 : index
    %21 = vector.load %arg4[%c0_10, %c128] : memref<64x256xf32, #tpu.memory_space<vmem>>, vector<64x128xf32>
    tpu.vector_store %arg4[%c0_10, %c128], %20 {strides = array<i32>} : memref<64x256xf32, #tpu.memory_space<vmem>>, vector<64x128xf32>,
    return
  }
  func.func @transform_0(%arg0: i32) -> (i32, i32, i32) {
    %c0_i32 = arith.constant 0 : i32
    %c0_i32_0 = arith.constant 0 : i32
    %c0_i32_1 = arith.constant 0 : i32
    return %c0_i32, %arg0, %c0_i32_0 : i32, i32, i32
  }
  func.func @transform_1(%arg0: i32) -> (i32, i32) {
    %c0_i32 = arith.constant 0 : i32
    %c0_i32_0 = arith.constant 0 : i32
    %c0_i32_1 = arith.constant 0 : i32
    return %c0_i32, %c0_i32_0 : i32, i32
  }
  func.func @transform_2(%arg0: i32) -> (i32, i32) {
    %c0_i32 = arith.constant 0 : i32
    %c0_i32_0 = arith.constant 0 : i32
    %c0_i32_1 = arith.constant 0 : i32
    return %c0_i32, %c0_i32_0 : i32, i32
  }
  func.func @transform_3(%arg0: i32) -> (i32, i32) {
    %c0_i32 = arith.constant 0 : i32
    %c0_i32_0 = arith.constant 0 : i32
    return %arg0, %c0_i32 : i32, i32
  }
}

</mosaic_0001>

<llo_original>
// kernel: tpu_custom_call.1
$region0: #{tpu_custom_call.1}
  #allocation0 [shape = 'u32[]', space=smem, size = 0x4, offset = 0x4, fixed_abs, tag = 'smem constant byte address 0x4 - core index']
  #allocation1 [shape = 'u32[144,128]{1,0:T(1,128)}', space=vmem, size = 0x12000, scoped, tag = 'internal scratch']
  #allocation8 [shape = 's32[]', space=sflag, size = 0x4, offset = 0, fixed_abs, tag = 'sflag constant byte address 0x0 - dummy sync flag']
  %s0 = inlined_call_operand.hbm [shape: f32[2,200,128], index: 0, kind: input, shape index: {}]
  %s1 = inlined_call_operand.hbm [shape: bf16[128,128], index: 1, kind: input, shape index: {}]
  %s2 = inlined_call_operand.vmem [shape: f32[1,128], index: 2, kind: input, shape index: {}]
  %s3 = inlined_call_operand.hbm [shape: f32[200,256], index: 3, kind: output, shape index: {}]
  %s4 = sld [smem:[#allocation0]]
  $region53: #{tpu_custom_call.1} parent=0
    _
  %s6 = ssub.s32 1, %s4
  %s7 = scalar_select 0, %s6, %s4
  $region1: #{tpu_custom_call.1} parent=0
    #allocation2 [shape = 'u8[131072]{0}', space=vmem, size = 0x20000, scoped, tag = 'input window, operand 0']
    #allocation3 [shape = 's32[2]{0}', space=sflag, size = 0x8, scoped, tag = 'scoped memory for tpu_custom_call.1']
    #allocation4 [shape = 's32[2]{0}', space=sflag, size = 0x8, scoped, tag = 'scoped memory for tpu_custom_call.1']
    #allocation5 [shape = 'u8[32768]{0}', space=vmem, size = 0x8000, scoped, tag = 'input window, operand 1, single buffered']
    #allocation6 [shape = 's32[1]{0}', space=sflag, size = 0x4, scoped, tag = 'scoped memory for tpu_custom_call.1']
    #allocation7 [shape = 'u8[131072]{0}', space=vmem, size = 0x20000, scoped, tag = 'output window, operand 0']
    %8 = vsyncpa [#allocation3], 0
    %s9 = scalar_lea.sflag [#allocation3], 1
    %10 = vsyncpa %s9, 0
    %11 = vsyncpa [#allocation6], 0
    %12 = vsyncpa [#allocation4], 0
    %s13 = scalar_lea.sflag [#allocation4], 1
    %14 = vsyncpa %s13, 0
    loop: start=0, step=1, limit=6
    $region2: #{tpu_custom_call.1} parent=1 // loop_pre_header
      _
    $region3: #{tpu_custom_call.1} parent=1 // loop_header
      %s16 = sphi 0, %s20
      %p17 = scmp.ge.s32.totalorder %s16, 6
      %s26 = sphi 0, %s28
      %s29 = sphi 0, %s26
      %s30 = sphi 0, %s29
      %s46 = sphi 0, %s30
      %s50 = sphi 0, %s50
      %s52 = sphi 0, %s50
      %s53 = sphi 0, %s52
      %s67 = sphi 0, %s53
      %s71 = sphi 0, %s71
      %s73 = sphi 0, %s71
      %s74 = sphi 0, %s73
      %s88 = sphi 0, %s74
      %s94 = sphi 0, %s96
      %s97 = sphi 0, %s94
      %s98 = sphi 0, %s97
      %s114 = sphi 0, %s98
    $region4: #{tpu_custom_call.1} parent=1 // loop_header_branch
      %19 = sbr.rel (%p17) target = $region8
    $region5: #{tpu_custom_call.1} parent=1 // loop_body
      %s21 = ssub.s32 %s16, 1
      %s22 = ssub.s32 %s16, 2
      %s23 = sadd.s32 %s16, 1
      %s24 = ssub.s32 %s16, %s23
      %p25 = scmp.eq.s32.totalorder %s24, 0
      %s27 = sadd.s32 %s26, 1
      %s28 = scalar_select %p25, %s26, %s27
      %p31 = pneg %p25
      %p32 = scmp.eq.s32.totalorder %s16, 3
      %p33 = por %p31, %p32
      %p34 = scmp.ne.s32.totalorder %s26, %s29
      %p35 = scmp.eq.s32.totalorder %s16, 0
      %p36 = por %p34, %p35
      %p37 = scmp.ne.s32.totalorder %s26, %s29
      %p38 = scmp.eq.s32.totalorder %s21, 3
      %p39 = por %p37, %p38
      %p40 = scmp.ne.s32.totalorder %s29, %s30
      %p41 = scmp.eq.s32.totalorder %s21, 0
      %p42 = por %p40, %p41
      %p43 = scmp.ne.s32.totalorder %s29, %s30
      %p44 = scmp.eq.s32.totalorder %s22, 3
      %p45 = por %p43, %p44
      %p47 = scmp.ne.s32.totalorder %s30, %s46
      %p48 = scmp.eq.s32.totalorder %s22, 0
      %p49 = por %p47, %p48
      %s51 = sadd.s32 %s50, 1
      %p54 = scmp.eq.s32.totalorder %s16, 3
      %p55 = scmp.ne.s32.totalorder %s50, %s52
      %p56 = scmp.eq.s32.totalorder %s16, 0
      %p57 = por %p55, %p56
      %p58 = scmp.ne.s32.totalorder %s50, %s52
      %p59 = scmp.eq.s32.totalorder %s21, 3
      %p60 = por %p58, %p59
      %p61 = scmp.ne.s32.totalorder %s52, %s53
      %p62 = scmp.eq.s32.totalorder %s21, 0
      %p63 = por %p61, %p62
      %p64 = scmp.ne.s32.totalorder %s52, %s53
      %p65 = scmp.eq.s32.totalorder %s22, 3
      %p66 = por %p64, %p65
      %p68 = scmp.ne.s32.totalorder %s53, %s67
      %p69 = scmp.eq.s32.totalorder %s22, 0
      %p70 = por %p68, %p69
      %s72 = sadd.s32 %s71, 1
      %p75 = scmp.eq.s32.totalorder %s16, 3
      %p76 = scmp.ne.s32.totalorder %s71, %s73
      %p77 = scmp.eq.s32.totalorder %s16, 0
      %p78 = por %p76, %p77
      %p79 = scmp.ne.s32.totalorder %s71, %s73
      %p80 = scmp.eq.s32.totalorder %s21, 3
      %p81 = por %p79, %p80
      %p82 = scmp.ne.s32.totalorder %s73, %s74
      %p83 = scmp.eq.s32.totalorder %s21, 0
      %p84 = por %p82, %p83
      %p85 = scmp.ne.s32.totalorder %s73, %s74
      %p86 = scmp.eq.s32.totalorder %s22, 3
      %p87 = por %p85, %p86
      %p89 = scmp.ne.s32.totalorder %s74, %s88
      %p90 = scmp.eq.s32.totalorder %s22, 0
      %p91 = por %p89, %p90
      %s92 = ssub.s32 %s16, %s23
      %p93 = scmp.eq.s32.totalorder %s92, 0
      %s95 = sadd.s32 %s94, 1
      %s96 = scalar_select %p93, %s94, %s95
      %p99 = pneg %p93
      %p100 = scmp.eq.s32.totalorder %s16, 3
      %p101 = por %p99, %p100
      %p102 = scmp.ne.s32.totalorder %s94, %s97
      %p103 = scmp.eq.s32.totalorder %s16, 0
      %p104 = por %p102, %p103
      %p105 = scmp.ne.s32.totalorder %s94, %s97
      %p106 = scmp.eq.s32.totalorder %s21, 3
      %p107 = por %p105, %p106
      %p108 = scmp.ne.s32.totalorder %s97, %s98
      %p109 = scmp.eq.s32.totalorder %s21, 0
      %p110 = por %p108, %p109
      %p111 = scmp.ne.s32.totalorder %s97, %s98
      %p112 = scmp.eq.s32.totalorder %s22, 3
      %p113 = por %p111, %p112
      %p115 = scmp.ne.s32.totalorder %s98, %s114
      %p116 = scmp.eq.s32.totalorder %s22, 0
      %p117 = por %p115, %p116
      %p118 = scmp.le.s32.totalorder 1, %s16
      %p119 = scmp.lt.s32.totalorder %s16, 5
      %p120 = pnand %p118, %p119
      %p121 = pneg %p120
      // Predicated region
      $region9: #{tpu_custom_call.1} parent=5 // pred_check
        _
      $region10: #{tpu_custom_call.1} parent=5 // pred_check_branch
        %123 = sbr.rel (%p120) target = $region12
      $region11: #{tpu_custom_call.1} parent=5 // pred_region
        %s124 = ssub.s32 %s16, 1
        // Predicated region
        $region13: #{tpu_custom_call.1} parent=11 // pred_check
          %p125 = pneg %p63
        $region14: #{tpu_custom_call.1} parent=11 // pred_check_branch
          %127 = sbr.rel (%p125) target = $region16
        $region15: #{tpu_custom_call.1} parent=11 // pred_region
          %s129 = ssub.s32 1024, 1024
          %130 = vsyncadd [#allocation6], %s129
          %s131 = sshll.u32 [#allocation5], 4
          %s132 = int_to_ptr.vmem [resolvable:$true] %s131
          %137 = dma.hbm_to_vmem [thread:$0]  %s1, 1024, %s132, [#allocation6], 64, 64, 4
        $region16: #{tpu_custom_call.1} parent=11 // pred_fallthru
          _
        // Predicated region
        $region17: #{tpu_custom_call.1} parent=11 // pred_check
          %p138 = pneg %p84
        $region18: #{tpu_custom_call.1} parent=11 // pred_check_branch
          %140 = sbr.rel (%p138) target = $region20
        $region19: #{tpu_custom_call.1} parent=11 // pred_region
          _
        $region20: #{tpu_custom_call.1} parent=11 // pred_fallthru
          _
      $region12: #{tpu_custom_call.1} parent=5 // pred_fallthru
        _
      %p141 = scmp.lt.s32.totalorder %s16, 4
      // Predicated region
      $region21: #{tpu_custom_call.1} parent=5 // pred_check
        %p142 = pneg %p141
      $region22: #{tpu_custom_call.1} parent=5 // pred_check_branch
        %144 = sbr.rel (%p142) target = $region24
      $region23: #{tpu_custom_call.1} parent=5 // pred_region
        // Predicated region
        $region25: #{tpu_custom_call.1} parent=23 // pred_check
          %p145 = pneg %p36
        $region26: #{tpu_custom_call.1} parent=23 // pred_check_branch
          %147 = sbr.rel (%p145) target = $region28
        $region27: #{tpu_custom_call.1} parent=23 // pred_region
          #allocation9 [shape = 'u32[6]{0}', space=smem, size = 0x18, scoped, tag = 'DMA stride descriptor']
          %s148 = sand.u32 %s26, 1
          %s149 = scalar_lea.sflag [#allocation3], %s148
          %s150 = sand.u32 %s26, 1
          %s151 = smul.addr %s150, 128
          %s152 = scalar_lea.vmem [#allocation2], %s151
          %s153 = smul.u32 8, %s16
          %s154 = ssub.s32 25, %s153
          %p155 = scmp.lt.s32.totalorder %s154, 8
          %s156 = scalar_select %p155, %s154, 8
          %s157 = smul.u32 256, %s156
          %s159 = ssub.s32 2048, %s157
          %160 = vsyncadd %s149, %s159
          %p161 = scmp.ne.s32.totalorder 0, %s157
          %s162 = smul.addr %s153, 128
          %s163 = scalar_lea.hbm %s0, %s162
          %s164 = smul.u32 8, %s156
          %s165 = smul.u32 %s164, 2
          %s167 = sshll.u32 1, 14
          %s168 = sxor.u32 4294967295, %s167
          %s170 = sld [smem:[#allocation0]]
          %s171 = sadd.s32 2, %s170
          %s173 = sshll.u32 7, 26
          %s174 = sxor.u32 4294967295, %s173
          %s175 = sand.u32 0, %s174
          %s176 = sshll.u32 %s171, 26
          %s177 = sor.u32 %s175, %s176
          %s178 = sshll.u32 %s152, 4
          %s179 = int_to_ptr.vmem [resolvable:$true] %s178
          %s180 = sshll.u32 %s165, 4
          %185 = sst [smem:[#allocation9]] 3200
          %s186 = scalar_lea.smem [#allocation9], 1
          %187 = sst [smem:[%s186]] 1024
          %s188 = scalar_lea.smem [#allocation9], 2
          %189 = sst [smem:[%s188]] %s156
          %s190 = scalar_lea.smem [#allocation9], 3
          %191 = sst [smem:[%s190]] 128
          %s192 = scalar_lea.smem [#allocation9], 4
          %193 = sst [smem:[%s192]] 128
          %s194 = scalar_lea.smem [#allocation9], 5
          %195 = sst [smem:[%s194]] 8
          %197 = dma.general (%p161), %s163, %s180, %s179, %s149, 131072, [#allocation9], %s177, 0
        $region28: #{tpu_custom_call.1} parent=23 // pred_fallthru
          _
      $region24: #{tpu_custom_call.1} parent=5 // pred_fallthru
        _
      %p198 = scmp.le.s32.totalorder 1, %s16
      %p199 = scmp.lt.s32.totalorder %s16, 5
      %p200 = pnand %p198, %p199
      %p201 = pneg %p200
      // Predicated region
      $region29: #{tpu_custom_call.1} parent=5 // pred_check
        _
      $region30: #{tpu_custom_call.1} parent=5 // pred_check_branch
        %203 = sbr.rel (%p200) target = $region32
      $region31: #{tpu_custom_call.1} parent=5 // pred_region
        %s204 = ssub.s32 %s16, 1
        %s205 = sand.u32 %s29, 1
        %s206 = scalar_lea.sflag [#allocation3], %s205
        %s207 = sand.u32 %s29, 1
        %s208 = smul.addr %s207, 128
        %s209 = scalar_lea.vmem [#allocation2], %s208
        // Predicated region
        $region33: #{tpu_custom_call.1} parent=31 // pred_check
          %p210 = pneg %p42
        $region34: #{tpu_custom_call.1} parent=31 // pred_check_branch
          %212 = sbr.rel (%p210) target = $region36
        $region35: #{tpu_custom_call.1} parent=31 // pred_region
          %213 = dma.done %s206, 2048
        $region36: #{tpu_custom_call.1} parent=31 // pred_fallthru
          _
        // Predicated region
        $region37: #{tpu_custom_call.1} parent=31 // pred_check
          %p214 = pneg %p63
        $region38: #{tpu_custom_call.1} parent=31 // pred_check_branch
          %216 = sbr.rel (%p214) target = $region40
        $region39: #{tpu_custom_call.1} parent=31 // pred_region
          %217 = dma.done [#allocation6], 1024
        $region40: #{tpu_custom_call.1} parent=31 // pred_fallthru
          _
        %s218 = sand.u32 %s29, 1
        %s219 = scalar_lea.sflag [#allocation3], %s218
        %s220 = sand.u32 %s29, 1
        %s221 = smul.addr %s220, 128
        %s222 = scalar_lea.vmem [#allocation2], %s221
        %p223 = pneg %p42
        %p224 = pneg %p39
        %p225 = pneg %p63
        %p226 = pneg %p60
        %p227 = pneg %p84
        %p228 = pneg %p81
        %p229 = pneg %p110
        %p230 = pneg %p107
        %s231 = sand.u32 %s97, 1
        %s232 = scalar_lea.sflag [#allocation4], %s231
        %s233 = sand.u32 %s97, 1
        %s234 = smul.addr %s233, 128
        %s235 = scalar_lea.vmem [#allocation7], %s234
        %s236 = smul.u32 8, %s21
        %s237 = ssub.s32 25, %s236
        %p238 = scmp.lt.s32.totalorder %s237, 8
        %s239 = scalar_select %p238, %s237, 8
        %s240 = smul.u32 256, %s239
        %s241 = smul.u32 8, %s21
        %s242 = ssub.s32 25, %s241
        %p243 = scmp.lt.s32.totalorder %s242, 8
        %s244 = scalar_select %p243, %s242, 8
        %s245 = smul.u32 128, %s244
        %s246 = smul.u32 %s245, 2
        %v248 = vld [vmem:[%s209] sm:$0xff]
        %v249 = vld [vmem:[%s209 + $0x8] sm:$0xff]
        %v250 = vld [vmem:[%s209 + $0x10] sm:$0xff]
        %v251 = vld [vmem:[%s209 + $0x18] sm:$0xff]
        %v252 = vld [vmem:[%s209 + $0x20] sm:$0xff]
        %v253 = vld [vmem:[%s209 + $0x28] sm:$0xff]
        %v254 = vld [vmem:[%s209 + $0x30] sm:$0xff]
        %v255 = vld [vmem:[%s209 + $0x38] sm:$0xff]
        %v256 = vld [vmem:[%s209 + $0x40] sm:$0xff]
        %v257 = vld [vmem:[%s209 + $0x48] sm:$0xff]
        %v258 = vld [vmem:[%s209 + $0x50] sm:$0xff]
        %v259 = vld [vmem:[%s209 + $0x58] sm:$0xff]
        %v260 = vld [vmem:[%s209 + $0x60] sm:$0xff]
        %v261 = vld [vmem:[%s209 + $0x68] sm:$0xff]
        %v262 = vld [vmem:[%s209 + $0x70] sm:$0xff]
        %v263 = vld [vmem:[%s209 + $0x78] sm:$0xff]
        %v264 = vpack.c.bf16 %v249, %v248
        %v265 = vpack.c.bf16 %v251, %v250
        %v266 = vpack.c.bf16 %v253, %v252
        %v267 = vpack.c.bf16 %v255, %v254
        %v268 = vpack.c.bf16 %v257, %v256
        %v269 = vpack.c.bf16 %v259, %v258
        %v270 = vpack.c.bf16 %v261, %v260
        %v271 = vpack.c.bf16 %v263, %v262
        %v272 = vld [vmem:[#allocation5] sm:$0xf]
        %v273 = vld [vmem:[#allocation5 + $0x4] sm:$0xf]
        %v274 = vld [vmem:[#allocation5 + $0x8] sm:$0xf]
        %v275 = vld [vmem:[#allocation5 + $0xc] sm:$0xf]
        %v276 = vld [vmem:[#allocation5 + $0x10] sm:$0xf]
        %v277 = vld [vmem:[#allocation5 + $0x14] sm:$0xf]
        %v278 = vld [vmem:[#allocation5 + $0x18] sm:$0xf]
        %v279 = vld [vmem:[#allocation5 + $0x1c] sm:$0xf]
        %v280 = vld [vmem:[#allocation5 + $0x20] sm:$0xf]
        %v281 = vld [vmem:[#allocation5 + $0x24] sm:$0xf]
        %v282 = vld [vmem:[#allocation5 + $0x28] sm:$0xf]
        %v283 = vld [vmem:[#allocation5 + $0x2c] sm:$0xf]
        %v284 = vld [vmem:[#allocation5 + $0x30] sm:$0xf]
        %v285 = vld [vmem:[#allocation5 + $0x34] sm:$0xf]
        %v286 = vld [vmem:[#allocation5 + $0x38] sm:$0xf]
        %v287 = vld [vmem:[#allocation5 + $0x3c] sm:$0xf]
        %v288 = vld [vmem:[%s2] sm:$0x1]
        %v290 = vlaneseq
        %v291 = vshrl.u32 %v290, 7
        %v292 = vsub.s32 0, %v291
        %v293 = vrot.slane %v288, %v292
        %v311 = vunpack.c.l.b16 %v272
        %v312 = vunpack.c.l.b16 %v273
        %v313 = vunpack.c.l.b16 %v274
        %v314 = vunpack.c.l.b16 %v275
        %v315 = vunpack.c.l.b16 %v276
        %v316 = vunpack.c.l.b16 %v277
        %v317 = vunpack.c.l.b16 %v278
        %v318 = vunpack.c.l.b16 %v279
        %v319 = vunpack.c.l.b16 %v280
        %v320 = vunpack.c.l.b16 %v281
        %v321 = vunpack.c.l.b16 %v282
        %v322 = vunpack.c.l.b16 %v283
        %v323 = vunpack.c.l.b16 %v284
        %v324 = vunpack.c.l.b16 %v285
        %v325 = vunpack.c.l.b16 %v286
        %v326 = vunpack.c.l.b16 %v287
        %v327 = vpack.c.b16 %v312, %v311
        %v328 = vpack.c.b16 %v314, %v313
        %v329 = vpack.c.b16 %v316, %v315
        %v330 = vpack.c.b16 %v318, %v317
        %v331 = vpack.c.b16 %v320, %v319
        %v332 = vpack.c.b16 %v322, %v321
        %v333 = vpack.c.b16 %v324, %v323
        %v334 = vpack.c.b16 %v326, %v325
        %343 = vmatprep.subr.bf16.mxu0 0
        %344 = vmatpush1.bf16.msra.mxu0 %v334
        %345 = vmatprep.subr.bf16.mxu0 0
        %346 = vmatpush1.bf16.msra.mxu0 %v333
        %347 = vmatprep.subr.bf16.mxu0 0
        %348 = vmatpush1.bf16.msra.mxu0 %v332
        %349 = vmatprep.subr.bf16.mxu0 0
        %350 = vmatpush1.bf16.msra.mxu0 %v331
        %351 = vmatprep.subr.bf16.mxu0 0
        %352 = vmatpush1.bf16.msra.mxu0 %v330
        %353 = vmatprep.subr.bf16.mxu0 0
        %354 = vmatpush1.bf16.msra.mxu0 %v329
        %355 = vmatprep.subr.bf16.mxu0 0
        %356 = vmatpush1.bf16.msra.mxu0 %v328
        %357 = vmatprep.subr.bf16.mxu0 0
        %358 = vmatpush1.bf16.msra.mxu0 %v327
        %359 = vmatprep.subr.bf16.mxu0 0
        %360 = vmatpush2.bf16.msra.mxu0 0
        %361 = vmatprep.subr.bf16.mxu0 0
        %362 = vmatpush2.bf16.msra.mxu0 0
        %363 = vmatprep.subr.bf16.mxu0 0
        %364 = vmatpush2.bf16.msra.mxu0 0
        %365 = vmatprep.subr.bf16.mxu0 0
        %366 = vmatpush2.bf16.msra.mxu0 0
        %367 = vmatprep.subr.bf16.mxu0 0
        %368 = vmatpush2.bf16.msra.mxu0 0
        %369 = vmatprep.subr.bf16.mxu0 0
        %370 = vmatpush2.bf16.msra.mxu0 0
        %371 = vmatprep.subr.bf16.mxu0 0
        %372 = vmatpush2.bf16.msra.mxu0 0
        %373 = vmatprep.subr.bf16.mxu0 0
        %374 = vmatpush2.bf16.msra.mxu0 0
        %375 = vmatprep.mubr.bf16.mxu0 0
        %376 = vmatmul.mubr.bf16.gmra.mxu0 %v264
        %v377 = vpop.f32.mrf.mxu0
        %v378 = vadd.f32 %v293, %v377
        %v379 = vpop.f32.mrf.mxu0
        %v380 = vpop.f32.mrf.mxu0
        %v381 = vadd.f32 %v293, %v380
        %v382 = vpop.f32.mrf.mxu0
        %383 = vmatprep.mubr.bf16.mxu0 0
        %384 = vmatmul.mubr.bf16.gmra.mxu0 %v265
        %v385 = vpop.f32.mrf.mxu0
        %v386 = vadd.f32 %v293, %v385
        %v387 = vpop.f32.mrf.mxu0
        %v388 = vpop.f32.mrf.mxu0
        %v389 = vadd.f32 %v293, %v388
        %v390 = vpop.f32.mrf.mxu0
        %391 = vmatprep.mubr.bf16.mxu0 0
        %392 = vmatmul.mubr.bf16.gmra.mxu0 %v266
        %v393 = vpop.f32.mrf.mxu0
        %v394 = vadd.f32 %v293, %v393
        %v395 = vpop.f32.mrf.mxu0
        %v396 = vpop.f32.mrf.mxu0
        %v397 = vadd.f32 %v293, %v396
        %v398 = vpop.f32.mrf.mxu0
        %399 = vmatprep.mubr.bf16.mxu0 0
        %400 = vmatmul.mubr.bf16.gmra.mxu0 %v267
        %v401 = vpop.f32.mrf.mxu0
        %v402 = vadd.f32 %v293, %v401
        %v403 = vpop.f32.mrf.mxu0
        %v404 = vpop.f32.mrf.mxu0
        %v405 = vadd.f32 %v293, %v404
        %v406 = vpop.f32.mrf.mxu0
        %407 = vmatprep.mubr.bf16.mxu0 0
        %408 = vmatmul.mubr.bf16.gmra.mxu0 %v268
        %v409 = vpop.f32.mrf.mxu0
        %v410 = vadd.f32 %v293, %v409
        %v411 = vpop.f32.mrf.mxu0
        %v412 = vpop.f32.mrf.mxu0
        %v413 = vadd.f32 %v293, %v412
        %v414 = vpop.f32.mrf.mxu0
        %415 = vmatprep.mubr.bf16.mxu0 0
        %416 = vmatmul.mubr.bf16.gmra.mxu0 %v269
        %v417 = vpop.f32.mrf.mxu0
        %v418 = vadd.f32 %v293, %v417
        %v419 = vpop.f32.mrf.mxu0
        %v420 = vpop.f32.mrf.mxu0
        %v421 = vadd.f32 %v293, %v420
        %v422 = vpop.f32.mrf.mxu0
        %423 = vmatprep.mubr.bf16.mxu0 0
        %424 = vmatmul.mubr.bf16.gmra.mxu0 %v270
        %v425 = vpop.f32.mrf.mxu0
        %v426 = vadd.f32 %v293, %v425
        %v427 = vpop.f32.mrf.mxu0
        %v428 = vpop.f32.mrf.mxu0
        %v429 = vadd.f32 %v293, %v428
        %v430 = vpop.f32.mrf.mxu0
        %431 = vmatprep.mubr.bf16.mxu0 0
        %432 = vmatmul.mubr.bf16.gmra.mxu0 %v271
        %v433 = vpop.f32.mrf.mxu0
        %v434 = vadd.f32 %v293, %v433
        %v435 = vpop.f32.mrf.mxu0
        %v436 = vpop.f32.mrf.mxu0
        %v437 = vadd.f32 %v293, %v436
        %v438 = vpop.f32.mrf.mxu0
        %439 = vdwg.mxu0
        %440 = vmax.xlane.f32.xlu0 %v378
        %v441 = vpop.xlane.xlu0 %440
        %442 = vmax.xlane.f32.xlu0 %v381
        %v443 = vpop.xlane.xlu0 %442
        %444 = vmax.xlane.f32.xlu0 %v386
        %v445 = vpop.xlane.xlu0 %444
        %446 = vmax.xlane.f32.xlu0 %v389
        %v447 = vpop.xlane.xlu0 %446
        %448 = vmax.xlane.f32.xlu0 %v394
        %v449 = vpop.xlane.xlu0 %448
        %450 = vmax.xlane.f32.xlu0 %v397
        %v451 = vpop.xlane.xlu0 %450
        %452 = vmax.xlane.f32.xlu0 %v402
        %v453 = vpop.xlane.xlu0 %452
        %454 = vmax.xlane.f32.xlu0 %v405
        %v455 = vpop.xlane.xlu0 %454
        %456 = vmax.xlane.f32.xlu0 %v410
        %v457 = vpop.xlane.xlu0 %456
        %458 = vmax.xlane.f32.xlu0 %v413
        %v459 = vpop.xlane.xlu0 %458
        %460 = vmax.xlane.f32.xlu0 %v418
        %v461 = vpop.xlane.xlu0 %460
        %462 = vmax.xlane.f32.xlu0 %v421
        %v463 = vpop.xlane.xlu0 %462
        %464 = vmax.xlane.f32.xlu0 %v426
        %v465 = vpop.xlane.xlu0 %464
        %466 = vmax.xlane.f32.xlu0 %v429
        %v467 = vpop.xlane.xlu0 %466
        %468 = vmax.xlane.f32.xlu0 %v434
        %v469 = vpop.xlane.xlu0 %468
        %470 = vmax.xlane.f32.xlu0 %v437
        %v471 = vpop.xlane.xlu0 %470
        %v472 = vsub.f32 %v378, %v441
        %v473 = vsub.f32 %v381, %v443
        %v474 = vsub.f32 %v386, %v445
        %v475 = vsub.f32 %v389, %v447
        %v476 = vsub.f32 %v394, %v449
        %v477 = vsub.f32 %v397, %v451
        %v478 = vsub.f32 %v402, %v453
        %v479 = vsub.f32 %v405, %v455
        %v480 = vsub.f32 %v410, %v457
        %v481 = vsub.f32 %v413, %v459
        %v482 = vsub.f32 %v418, %v461
        %v483 = vsub.f32 %v421, %v463
        %v484 = vsub.f32 %v426, %v465
        %v485 = vsub.f32 %v429, %v467
        %v486 = vsub.f32 %v434, %v469
        %v487 = vsub.f32 %v437, %v471
        %v488 = vmul.f32 %v472, 1.442695
        %v489 = vpow.pop %v488
        %v490 = vmul.f32 %v473, 1.442695
        %v491 = vpow.pop %v490
        %v492 = vmul.f32 %v474, 1.442695
        %v493 = vpow.pop %v492
        %v494 = vmul.f32 %v475, 1.442695
        %v495 = vpow.pop %v494
        %v496 = vmul.f32 %v476, 1.442695
        %v497 = vpow.pop %v496
        %v498 = vmul.f32 %v477, 1.442695
        %v499 = vpow.pop %v498
        %v500 = vmul.f32 %v478, 1.442695
        %v501 = vpow.pop %v500
        %v502 = vmul.f32 %v479, 1.442695
        %v503 = vpow.pop %v502
        %v504 = vmul.f32 %v480, 1.442695
        %v505 = vpow.pop %v504
        %v506 = vmul.f32 %v481, 1.442695
        %v507 = vpow.pop %v506
        %v508 = vmul.f32 %v482, 1.442695
        %v509 = vpow.pop %v508
        %v510 = vmul.f32 %v483, 1.442695
        %v511 = vpow.pop %v510
        %v512 = vmul.f32 %v484, 1.442695
        %v513 = vpow.pop %v512
        %v514 = vmul.f32 %v485, 1.442695
        %v515 = vpow.pop %v514
        %v516 = vmul.f32 %v486, 1.442695
        %v517 = vpow.pop %v516
        %v518 = vmul.f32 %v487, 1.442695
        %v519 = vpow.pop %v518
        %520 = vadd.xlane.f32.xlu0 %v489
        %v521 = vpop.xlane.xlu0 %520
        %522 = vadd.xlane.f32.xlu0 %v491
        %v523 = vpop.xlane.xlu0 %522
        %524 = vadd.xlane.f32.xlu0 %v493
        %v525 = vpop.xlane.xlu0 %524
        %526 = vadd.xlane.f32.xlu0 %v495
        %v527 = vpop.xlane.xlu0 %526
        %528 = vadd.xlane.f32.xlu0 %v497
        %v529 = vpop.xlane.xlu0 %528
        %530 = vadd.xlane.f32.xlu0 %v499
        %v531 = vpop.xlane.xlu0 %530
        %532 = vadd.xlane.f32.xlu0 %v501
        %v533 = vpop.xlane.xlu0 %532
        %534 = vadd.xlane.f32.xlu0 %v503
        %v535 = vpop.xlane.xlu0 %534
        %536 = vadd.xlane.f32.xlu0 %v505
        %v537 = vpop.xlane.xlu0 %536
        %538 = vadd.xlane.f32.xlu0 %v507
        %v539 = vpop.xlane.xlu0 %538
        %540 = vadd.xlane.f32.xlu0 %v509
        %v541 = vpop.xlane.xlu0 %540
        %542 = vadd.xlane.f32.xlu0 %v511
        %v543 = vpop.xlane.xlu0 %542
        %544 = vadd.xlane.f32.xlu0 %v513
        %v545 = vpop.xlane.xlu0 %544
        %546 = vadd.xlane.f32.xlu0 %v515
        %v547 = vpop.xlane.xlu0 %546
        %548 = vadd.xlane.f32.xlu0 %v517
        %v549 = vpop.xlane.xlu0 %548
        %550 = vadd.xlane.f32.xlu0 %v519
        %v551 = vpop.xlane.xlu0 %550
        %v552 = vlog2.pop %v521
        %v553 = vmul.f32 %v552, 0.6931472
        %v554 = vlog2.pop %v523
        %v555 = vmul.f32 %v554, 0.6931472
        %v556 = vlog2.pop %v525
        %v557 = vmul.f32 %v556, 0.6931472
        %v558 = vlog2.pop %v527
        %v559 = vmul.f32 %v558, 0.6931472
        %v560 = vlog2.pop %v529
        %v561 = vmul.f32 %v560, 0.6931472
        %v562 = vlog2.pop %v531
        %v563 = vmul.f32 %v562, 0.6931472
        %v564 = vlog2.pop %v533
        %v565 = vmul.f32 %v564, 0.6931472
        %v566 = vlog2.pop %v535
        %v567 = vmul.f32 %v566, 0.6931472
        %v568 = vlog2.pop %v537
        %v569 = vmul.f32 %v568, 0.6931472
        %v570 = vlog2.pop %v539
        %v571 = vmul.f32 %v570, 0.6931472
        %v572 = vlog2.pop %v541
        %v573 = vmul.f32 %v572, 0.6931472
        %v574 = vlog2.pop %v543
        %v575 = vmul.f32 %v574, 0.6931472
        %v576 = vlog2.pop %v545
        %v577 = vmul.f32 %v576, 0.6931472
        %v578 = vlog2.pop %v547
        %v579 = vmul.f32 %v578, 0.6931472
        %v580 = vlog2.pop %v549
        %v581 = vmul.f32 %v580, 0.6931472
        %v582 = vlog2.pop %v551
        %v583 = vmul.f32 %v582, 0.6931472
        %v584 = vsub.f32 %v472, %v553
        %v585 = vsub.f32 %v473, %v555
        %v586 = vsub.f32 %v474, %v557
        %v587 = vsub.f32 %v475, %v559
        %v588 = vsub.f32 %v476, %v561
        %v589 = vsub.f32 %v477, %v563
        %v590 = vsub.f32 %v478, %v565
        %v591 = vsub.f32 %v479, %v567
        %v592 = vsub.f32 %v480, %v569
        %v593 = vsub.f32 %v481, %v571
        %v594 = vsub.f32 %v482, %v573
        %v595 = vsub.f32 %v483, %v575
        %v596 = vsub.f32 %v484, %v577
        %v597 = vsub.f32 %v485, %v579
        %v598 = vsub.f32 %v486, %v581
        %v599 = vsub.f32 %v487, %v583
        %600 = vst [vmem:[%s235] sm:$0xff] %v584
        %601 = vst [vmem:[%s235 + $0x10] sm:$0xff] %v585
        %602 = vst [vmem:[%s235 + $0x20] sm:$0xff] %v586
        %603 = vst [vmem:[%s235 + $0x30] sm:$0xff] %v587
        %604 = vst [vmem:[%s235 + $0x40] sm:$0xff] %v588
        %605 = vst [vmem:[%s235 + $0x50] sm:$0xff] %v589
        %606 = vst [vmem:[%s235 + $0x60] sm:$0xff] %v590
        %607 = vst [vmem:[%s235 + $0x70] sm:$0xff] %v591
        %608 = vst [vmem:[%s235 + $0x8] sm:$0xff] %v592
        %609 = vst [vmem:[%s235 + $0x18] sm:$0xff] %v593
        %610 = vst [vmem:[%s235 + $0x28] sm:$0xff] %v594
        %611 = vst [vmem:[%s235 + $0x38] sm:$0xff] %v595
        %612 = vst [vmem:[%s235 + $0x48] sm:$0xff] %v596
        %613 = vst [vmem:[%s235 + $0x58] sm:$0xff] %v597
        %614 = vst [vmem:[%s235 + $0x68] sm:$0xff] %v598
        %615 = vst [vmem:[%s235 + $0x78] sm:$0xff] %v599
        %s616 = sand.u32 %s97, 1
        %s617 = scalar_lea.sflag [#allocation4], %s616
        %s618 = sand.u32 %s97, 1
        %s619 = smul.addr %s618, 128
        %s620 = scalar_lea.vmem [#allocation7], %s619
        // Predicated region
        $region41: #{tpu_custom_call.1} parent=31 // pred_check
          %p621 = pneg %p107
        $region42: #{tpu_custom_call.1} parent=31 // pred_check_branch
          %623 = sbr.rel (%p621) target = $region44
        $region43: #{tpu_custom_call.1} parent=31 // pred_region
          %s624 = smul.u32 8, %s21
          %s625 = ssub.s32 25, %s624
          %p626 = scmp.lt.s32.totalorder %s625, 8
          %s627 = scalar_select %p626, %s625, 8
          %s628 = smul.u32 128, %s627
          %s629 = smul.u32 %s628, 2
          %s631 = ssub.s32 2048, %s629
          %632 = vsyncadd %s617, %s631
          %p633 = scmp.ne.s32.totalorder 0, %s629
          %s634 = smul.addr %s624, 2
          %s635 = smul.addr %s634, 128
          %s636 = scalar_lea.hbm %s3, %s635
          %s637 = smul.u32 16, %s627
          %s638 = sshll.u32 %s620, 4
          %s639 = int_to_ptr.vmem [resolvable:$true] %s638
          %s640 = sshll.u32 %s637, 4
          %644 = dma.vmem_to_hbm [thread:$0]  (%p633), %s639, %s640, %s636, %s617, 256, 256, 16
        $region44: #{tpu_custom_call.1} parent=31 // pred_fallthru
          _
      $region32: #{tpu_custom_call.1} parent=5 // pred_fallthru
        _
      %p645 = scmp.le.s32.totalorder 2, %s16
      // Predicated region
      $region45: #{tpu_custom_call.1} parent=5 // pred_check
        %p646 = pneg %p645
      $region46: #{tpu_custom_call.1} parent=5 // pred_check_branch
        %648 = sbr.rel (%p646) target = $region48
      $region47: #{tpu_custom_call.1} parent=5 // pred_region
        %s649 = ssub.s32 %s16, 2
        // Predicated region
        $region49: #{tpu_custom_call.1} parent=47 // pred_check
          %p650 = pneg %p113
        $region50: #{tpu_custom_call.1} parent=47 // pred_check_branch
          %652 = sbr.rel (%p650) target = $region52
        $region51: #{tpu_custom_call.1} parent=47 // pred_region
          %s653 = sand.u32 %s98, 1
          %s654 = scalar_lea.sflag [#allocation4], %s653
          %s655 = sand.u32 %s98, 1
          %s656 = smul.addr %s655, 128
          %s657 = scalar_lea.vmem [#allocation7], %s656
          %658 = dma.done %s654, 2048
        $region52: #{tpu_custom_call.1} parent=47 // pred_fallthru
          _
      $region48: #{tpu_custom_call.1} parent=5 // pred_fallthru
        _
    $region6: #{tpu_custom_call.1} parent=1 // loop_footer
      %s20 = sadd.s32 1, %s16
    $region7: #{tpu_custom_call.1} parent=1 // loop_footer_branch
      %15 = sbr.rel target = $region3
    $region8: #{tpu_custom_call.1} parent=1 // loop_exit
      _
    %659 = vsyncpa [#allocation3], 1
    %s660 = scalar_lea.sflag [#allocation3], 1
    %661 = vsyncpa %s660, 1
    %662 = vsyncpa [#allocation6], 1
    %663 = vsyncpa [#allocation4], 1
    %s664 = scalar_lea.sflag [#allocation4], 1
    %665 = vsyncpa %s664, 1

</llo_original>
